<compile_context>
chip_gen: v7x
topology: tpu7x:2x2x1
jax: 0.10.0
libtpu: 0.0.40
codegen_flags: <defaults>
</compile_context>

<pallas_src>
import functools

import jax
import jax.numpy as jnp
from jax.experimental import pallas as pl
from jax.experimental.pallas import tpu as pltpu


# ---------------------------------------------------------------------------
# kernels
# ---------------------------------------------------------------------------
def _mp_kernel_strided(x_ref, o_ref, *, k, wo):
    """x_ref: (TR, k, Wo*k) block, W on lanes  ->  o_ref: (TR, Wo).

    kh-max: static integer index on the untiled middle axis (pure VPU max).
    kw-max: strided lane loads (stride k) directly from the VMEM block.
    """
    acc = None
    for kh in range(k):                       # k is tiny and static -> unrolled
        for kw in range(k):
            tap = x_ref[:, kh, pl.ds(kw, wo, stride=k)]      # (TR, Wo)
            acc = tap if acc is None else jnp.maximum(acc, tap)
    o_ref[...] = acc                          # dtype preserved bit-exactly


def _mp_kernel_taps(x_ref, o_ref, *, kk):
    """Fallback: x_ref: (TR, k*k, Wo) block with taps pre-separated -> (TR, Wo)."""
    x = x_ref[...]
    acc = x[:, 0]
    for t in range(1, kk):                    # purely elementwise VPU max
        acc = jnp.maximum(acc, x[:, t])
    o_ref[...] = acc


# ---------------------------------------------------------------------------
# tiling helpers
# ---------------------------------------------------------------------------
def _round_up(a, b):
    return -(-a // b) * b


def _padded_row_bytes(sub, lane, dtype):
    """VMEM bytes of one block-row, including (sublane, lane) tile padding."""
    it = jnp.dtype(dtype).itemsize
    native_sub = {4: 8, 2: 16, 1: 32}.get(it, 8)
    return _round_up(sub, native_sub) * _round_up(lane, 128) * it


def _choose_tile_rows(R, padded_row_bytes, target_bytes=4 * 1024 * 1024):
    """Largest divisor of R that is a multiple of 8 (or R itself), fits the
    per-block VMEM budget, and preferably leaves >= 2 (even) grid steps."""
    budget = max(1, target_bytes // max(padded_row_bytes, 1))
    divs = set()
    d = 1
    while d * d <= R:
        if R % d == 0:
            divs.add(d)
            divs.add(R // d)
        d += 1
    # Output block is (TR, Wo): its sublane dim TR must be a multiple of 8
    # or equal to the full array dim to satisfy the (8,128) BlockSpec rule.
    cand = sorted(t for t in divs if t % 8 == 0 or t == R)
    fits = [t for t in cand if t <= budget]
    if fits:
        multi = [t for t in fits if R // t >= 2]
        if multi:
            even = [t for t in multi if (R // t) % 2 == 0]
            return max(even) if even else max(multi)
        return max(fits)
    return min(cand)   # nothing fits the budget -> smallest legal tile


_COMPILER_PARAMS = pltpu.CompilerParams(
    dimension_semantics=("parallel",),
    vmem_limit_bytes=32 * 1024 * 1024,
)


# ---------------------------------------------------------------------------
# wrappers (both produce the output directly in NCHW order)
# ---------------------------------------------------------------------------
def _max_pool_nchw_strided(x, k):
    """Fast path: zero extra HBM passes (free reshapes only)."""
    N, C, H, W = x.shape
    Ho, Wo = H // k, W // k
    xs = x[:, :, :Ho * k, :Wo * k]            # PyTorch floor mode (usually a no-op)
    R, Wk = N * C * Ho, Wo * k
    xr = xs.reshape(R, k, Wk)                 # free row-major reinterpretation
    TR = _choose_tile_rows(R, _padded_row_bytes(k, Wk, x.dtype))
    y = pl.pallas_call(
        functools.partial(_mp_kernel_strided, k=k, wo=Wo),
        out_shape=jax.ShapeDtypeStruct((R, Wo), x.dtype),
        grid=(R // TR,),
        in_specs=[pl.BlockSpec((TR, k, Wk), lambda i: (i, 0, 0))],
        out_specs=pl.BlockSpec((TR, Wo), lambda i: (i, 0)),
        compiler_params=_COMPILER_PARAMS,
    )(xr)
    return y.reshape(N, C, Ho, Wo)


def _max_pool_nchw_taps(x, k):
    """Fallback: one XLA permutation pre-separates the k*k taps; the kernel is
    purely elementwise (no strided / cross-lane ops at all)."""
    N, C, H, W = x.shape
    Ho, Wo = H // k, W // k
    xs = x[:, :, :Ho * k, :Wo * k]
    R = N * C * Ho
    xt = xs.reshape(N, C, Ho, k, Wo, k).transpose(0, 1, 2, 3, 5, 4)
    xt = xt.reshape(R, k * k, Wo)
    TR = _choose_tile_rows(R, _padded_row_bytes(k * k, Wo, x.dtype))
    y = pl.pallas_call(
        functools.partial(_mp_kernel_taps, kk=k * k),
        out_shape=jax.ShapeDtypeStruct((R, Wo), x.dtype),
        grid=(R // TR,),
        in_specs=[pl.BlockSpec((TR, k * k, Wo), lambda i: (i, 0, 0))],
        out_specs=pl.BlockSpec((TR, Wo), lambda i: (i, 0)),
        compiler_params=_COMPILER_PARAMS,
    )(xt)
    return y.reshape(N, C, Ho, Wo)


_primary = jax.jit(_max_pool_nchw_strided, static_argnames=("k",))
_fallback = jax.jit(_max_pool_nchw_taps, static_argnames=("k",))


def _reference_pool(x, k):
    N, C, H, W = x.shape
    Ho, Wo = H // k, W // k
    xs = x[:, :, :Ho * k, :Wo * k]
    return jnp.max(xs.reshape(N, C, Ho, k, Wo, k), axis=(3, 5))


_PATH_CACHE = {}


def mp_forward(x, k=2):
    """Forward pass of MP (nn.MaxPool2d(kernel_size=k, stride=k)) on NCHW input."""
    key = (tuple(x.shape), str(jnp.dtype(x.dtype)), int(k))
    path = _PATH_CACHE.get(key)
    if path is None:
        # First call for this config: try the NCHW-native strided kernel and
        # verify it bit-exactly; fall back if Mosaic rejects it or it mismatches.
        try:
            y = _primary(x, k=k)
            jax.block_until_ready(y)
            ok = bool(jnp.array_equal(y, _reference_pool(x, k), equal_nan=True))
        except Exception:
            ok = False
        path = "strided" if ok else "taps"
        _PATH_CACHE[key] = path
        if ok:
            return y
    if path == "strided":
        return _primary(x, k=k)
    return _fallback(x, k=k)


if __name__ == "__main__":
    key = jax.random.PRNGKey(0)
    x = jax.random.normal(key, (2, 4, 16, 16), jnp.float32)   # NCHW input

    y = mp_forward(x, k=2)
    jax.block_until_ready(y)

    assert y.shape == (2, 4, 8, 8), y.shape
    # reference: non-overlapping 2x2 window max — must match bit-exactly
    ref = jnp.max(x.reshape(2, 4, 8, 2, 8, 2), axis=(3, 5))
    assert bool(jnp.array_equal(y, ref)), float(jnp.max(jnp.abs(y - ref)))
    assert bool(jnp.all(jnp.isfinite(y)))
    print("KERNEL_OK")
</pallas_src>

<mosaic_0001>
module attributes {stable_mosaic.version = 11 : i64} {
  func.func @_mp_kernel_strided(%arg0: i32, %arg1: memref<32x2x16xf32, #tpu.memory_space<vmem>>, %arg2: memref<32x8xf32, #tpu.memory_space<vmem>>) attributes {dimension_semantics = [#tpu.dimension_semantics<parallel>], iteration_bounds = array<i64: 2>, scalar_prefetch = 0 : i64, scratch_operands = 0 : i64, tpu.core_type = #tpu.core_type<tc>, window_params = [{transform_indices = @transform_0, window_bounds = array<i64: 32, 2, 16>}, {transform_indices = @transform_1, window_bounds = array<i64: 32, 8>}]} {
    %c0 = arith.constant 0 : index
    %c0_0 = arith.constant 0 : index
    %c0_1 = arith.constant 0 : index
    %0 = tpu.strided_load %arg1[%c0, %c0_0, %c0_1] {strides = array<i32: 1, 1, 2>} : memref<32x2x16xf32, #tpu.memory_space<vmem>>, vector<32x1x8xf32>
    %1 = vector.shape_cast %0 : vector<32x1x8xf32> to vector<32x8xf32>
    %c0_2 = arith.constant 0 : index
    %c0_3 = arith.constant 0 : index
    %c1 = arith.constant 1 : index
    %2 = tpu.strided_load %arg1[%c0_2, %c0_3, %c1] {strides = array<i32: 1, 1, 2>} : memref<32x2x16xf32, #tpu.memory_space<vmem>>, vector<32x1x8xf32>
    %3 = vector.shape_cast %2 : vector<32x1x8xf32> to vector<32x8xf32>
    %4 = arith.maximumf %1, %3 : vector<32x8xf32>
    %c0_4 = arith.constant 0 : index
    %c1_5 = arith.constant 1 : index
    %c0_6 = arith.constant 0 : index
    %5 = tpu.strided_load %arg1[%c0_4, %c1_5, %c0_6] {strides = array<i32: 1, 1, 2>} : memref<32x2x16xf32, #tpu.memory_space<vmem>>, vector<32x1x8xf32>
    %6 = vector.shape_cast %5 : vector<32x1x8xf32> to vector<32x8xf32>
    %7 = arith.maximumf %4, %6 : vector<32x8xf32>
    %c0_7 = arith.constant 0 : index
    %c1_8 = arith.constant 1 : index
    %c1_9 = arith.constant 1 : index
    %8 = tpu.strided_load %arg1[%c0_7, %c1_8, %c1_9] {strides = array<i32: 1, 1, 2>} : memref<32x2x16xf32, #tpu.memory_space<vmem>>, vector<32x1x8xf32>
    %9 = vector.shape_cast %8 : vector<32x1x8xf32> to vector<32x8xf32>
    %10 = arith.maximumf %7, %9 : vector<32x8xf32>
    %c0_10 = arith.constant 0 : index
    %c0_11 = arith.constant 0 : index
    %11 = vector.load %arg2[%c0_10, %c0_11] : memref<32x8xf32, #tpu.memory_space<vmem>>, vector<32x8xf32>
    tpu.vector_store %arg2[%c0_10, %c0_11], %10 {strides = array<i32>} : memref<32x8xf32, #tpu.memory_space<vmem>>, vector<32x8xf32>,
    return
  }
  func.func @transform_0(%arg0: i32) -> (i32, i32, i32) {
    %c0_i32 = arith.constant 0 : i32
    %c0_i32_0 = arith.constant 0 : i32
    %c0_i32_1 = arith.constant 0 : i32
    return %arg0, %c0_i32, %c0_i32_0 : i32, i32, i32
  }
  func.func @transform_1(%arg0: i32) -> (i32, i32) {
    %c0_i32 = arith.constant 0 : i32
    %c0_i32_0 = arith.constant 0 : i32
    return %arg0, %c0_i32 : i32, i32
  }
}

module attributes {stable_mosaic.version = 11 : i64} {
  func.func @_mp_kernel_taps(%arg0: i32, %arg1: memref<32x4x8xf32, #tpu.memory_space<vmem>>, %arg2: memref<32x8xf32, #tpu.memory_space<vmem>>) attributes {dimension_semantics = [#tpu.dimension_semantics<parallel>], iteration_bounds = array<i64: 2>, scalar_prefetch = 0 : i64, scratch_operands = 0 : i64, tpu.core_type = #tpu.core_type<tc>, window_params = [{transform_indices = @transform_0, window_bounds = array<i64: 32, 4, 8>}, {transform_indices = @transform_1, window_bounds = array<i64: 32, 8>}]} {
    %c0 = arith.constant 0 : index
    %c0_0 = arith.constant 0 : index
    %c0_1 = arith.constant 0 : index
    %0 = vector.load %arg1[%c0, %c0_0, %c0_1] : memref<32x4x8xf32, #tpu.memory_space<vmem>>, vector<32x4x8xf32>
    %1 = vector.extract_strided_slice %0 {offsets = [0, 0, 0], sizes = [32, 1, 8], strides = [1, 1, 1]} : vector<32x4x8xf32> to vector<32x1x8xf32>
    %2 = vector.shape_cast %1 : vector<32x1x8xf32> to vector<32x8xf32>
    %3 = vector.extract_strided_slice %0 {offsets = [0, 1, 0], sizes = [32, 1, 8], strides = [1, 1, 1]} : vector<32x4x8xf32> to vector<32x1x8xf32>
    %4 = vector.shape_cast %3 : vector<32x1x8xf32> to vector<32x8xf32>
    %5 = arith.maximumf %2, %4 : vector<32x8xf32>
    %6 = vector.extract_strided_slice %0 {offsets = [0, 2, 0], sizes = [32, 1, 8], strides = [1, 1, 1]} : vector<32x4x8xf32> to vector<32x1x8xf32>
    %7 = vector.shape_cast %6 : vector<32x1x8xf32> to vector<32x8xf32>
    %8 = arith.maximumf %5, %7 : vector<32x8xf32>
    %9 = vector.extract_strided_slice %0 {offsets = [0, 3, 0], sizes = [32, 1, 8], strides = [1, 1, 1]} : vector<32x4x8xf32> to vector<32x1x8xf32>
    %10 = vector.shape_cast %9 : vector<32x1x8xf32> to vector<32x8xf32>
    %11 = arith.maximumf %8, %10 : vector<32x8xf32>
    %c0_2 = arith.constant 0 : index
    %c0_3 = arith.constant 0 : index
    %12 = vector.load %arg2[%c0_2, %c0_3] : memref<32x8xf32, #tpu.memory_space<vmem>>, vector<32x8xf32>
    tpu.vector_store %arg2[%c0_2, %c0_3], %11 {strides = array<i32>} : memref<32x8xf32, #tpu.memory_space<vmem>>, vector<32x8xf32>,
    return
  }
  func.func @transform_0(%arg0: i32) -> (i32, i32, i32) {
    %c0_i32 = arith.constant 0 : i32
    %c0_i32_0 = arith.constant 0 : i32
    %c0_i32_1 = arith.constant 0 : i32
    return %arg0, %c0_i32, %c0_i32_0 : i32, i32, i32
  }
  func.func @transform_1(%arg0: i32) -> (i32, i32) {
    %c0_i32 = arith.constant 0 : i32
    %c0_i32_0 = arith.constant 0 : i32
    return %arg0, %c0_i32 : i32, i32
  }
}

</mosaic_0001>

<llo_original>
// kernel: _max_pool_nchw_taps.1
$region0: #{_max_pool_nchw_taps.1}
  #allocation0 [shape = 'u32[]', space=smem, size = 0x4, offset = 0x4, fixed_abs, tag = 'smem constant byte address 0x4 - core index']
  #allocation1 [shape = 'u32[144,128]{1,0:T(1,128)}', space=vmem, size = 0x12000, scoped, tag = 'internal scratch']
  %s0 = inlined_call_operand.vmem [shape: f32[64,4,8], index: 0, kind: input, shape index: {}]
  %s1 = inlined_call_operand.hbm [shape: f32[64,8], index: 1, kind: output, shape index: {}]
  %s2 = sld [smem:[#allocation0]]
  $region37: #{_max_pool_nchw_taps.1} parent=0
    _
  %s4 = ssub.s32 1, %s2
  %s5 = scalar_select 0, %s4, %s2
  $region1: #{_max_pool_nchw_taps.1} parent=0
    #allocation2 [shape = 'u8[32768]{0}', space=vmem, size = 0x8000, scoped, tag = 'output window, operand 0']
    #allocation3 [shape = 's32[2]{0}', space=sflag, size = 0x8, scoped, tag = 'scoped memory for _max_pool_nchw_taps.1']
    %6 = vsyncpa [#allocation3], 0
    %s7 = scalar_lea.sflag [#allocation3], 1
    %8 = vsyncpa %s7, 0
    loop: start=0, step=1, limit=4
    $region2: #{_max_pool_nchw_taps.1} parent=1 // loop_pre_header
      _
    $region3: #{_max_pool_nchw_taps.1} parent=1 // loop_header
      %s10 = sphi 0, %s14
      %p11 = scmp.ge.s32.totalorder %s10, 4
      %s20 = sphi 0, %s22
      %s23 = sphi 0, %s20
      %s24 = sphi 0, %s23
      %s40 = sphi 0, %s24
      %s46 = sphi 0, %s48
      %s49 = sphi 0, %s46
      %s50 = sphi 0, %s49
      %s66 = sphi 0, %s50
    $region4: #{_max_pool_nchw_taps.1} parent=1 // loop_header_branch
      %13 = sbr.rel (%p11) target = $region8
    $region5: #{_max_pool_nchw_taps.1} parent=1 // loop_body
      %s15 = ssub.s32 %s10, 1
      %s16 = ssub.s32 %s10, 2
      %s17 = sadd.s32 %s10, 1
      %s18 = ssub.s32 %s10, %s17
      %p19 = scmp.eq.s32.totalorder %s18, 0
      %s21 = sadd.s32 %s20, 1
      %s22 = scalar_select %p19, %s20, %s21
      %p25 = pneg %p19
      %p26 = scmp.eq.s32.totalorder %s10, 1
      %p27 = por %p25, %p26
      %p28 = scmp.ne.s32.totalorder %s20, %s23
      %p29 = scmp.eq.s32.totalorder %s10, 0
      %p30 = por %p28, %p29
      %p31 = scmp.ne.s32.totalorder %s20, %s23
      %p32 = scmp.eq.s32.totalorder %s15, 1
      %p33 = por %p31, %p32
      %p34 = scmp.ne.s32.totalorder %s23, %s24
      %p35 = scmp.eq.s32.totalorder %s15, 0
      %p36 = por %p34, %p35
      %p37 = scmp.ne.s32.totalorder %s23, %s24
      %p38 = scmp.eq.s32.totalorder %s16, 1
      %p39 = por %p37, %p38
      %p41 = scmp.ne.s32.totalorder %s24, %s40
      %p42 = scmp.eq.s32.totalorder %s16, 0
      %p43 = por %p41, %p42
      %s44 = ssub.s32 %s10, %s17
      %p45 = scmp.eq.s32.totalorder %s44, 0
      %s47 = sadd.s32 %s46, 1
      %s48 = scalar_select %p45, %s46, %s47
      %p51 = pneg %p45
      %p52 = scmp.eq.s32.totalorder %s10, 1
      %p53 = por %p51, %p52
      %p54 = scmp.ne.s32.totalorder %s46, %s49
      %p55 = scmp.eq.s32.totalorder %s10, 0
      %p56 = por %p54, %p55
      %p57 = scmp.ne.s32.totalorder %s46, %s49
      %p58 = scmp.eq.s32.totalorder %s15, 1
      %p59 = por %p57, %p58
      %p60 = scmp.ne.s32.totalorder %s49, %s50
      %p61 = scmp.eq.s32.totalorder %s15, 0
      %p62 = por %p60, %p61
      %p63 = scmp.ne.s32.totalorder %s49, %s50
      %p64 = scmp.eq.s32.totalorder %s16, 1
      %p65 = por %p63, %p64
      %p67 = scmp.ne.s32.totalorder %s50, %s66
      %p68 = scmp.eq.s32.totalorder %s16, 0
      %p69 = por %p67, %p68
      %p70 = scmp.le.s32.totalorder 1, %s10
      %p71 = scmp.lt.s32.totalorder %s10, 3
      %p72 = pnand %p70, %p71
      %p73 = pneg %p72
      // Predicated region
      $region9: #{_max_pool_nchw_taps.1} parent=5 // pred_check
        _
      $region10: #{_max_pool_nchw_taps.1} parent=5 // pred_check_branch
        %75 = sbr.rel (%p72) target = $region12
      $region11: #{_max_pool_nchw_taps.1} parent=5 // pred_region
        %s76 = ssub.s32 %s10, 1
      $region12: #{_max_pool_nchw_taps.1} parent=5 // pred_fallthru
        _
      %p77 = scmp.lt.s32.totalorder %s10, 2
      // Predicated region
      $region13: #{_max_pool_nchw_taps.1} parent=5 // pred_check
        %p78 = pneg %p77
      $region14: #{_max_pool_nchw_taps.1} parent=5 // pred_check_branch
        %80 = sbr.rel (%p78) target = $region16
      $region15: #{_max_pool_nchw_taps.1} parent=5 // pred_region
        // Predicated region
        $region17: #{_max_pool_nchw_taps.1} parent=15 // pred_check
          %p81 = pneg %p30
        $region18: #{_max_pool_nchw_taps.1} parent=15 // pred_check_branch
          %83 = sbr.rel (%p81) target = $region20
        $region19: #{_max_pool_nchw_taps.1} parent=15 // pred_region
          %s84 = smul.u32 32, %s10
          %p85 = scmp.lt.s32.totalorder %s84, 63
          %s86 = scalar_select %p85, %s84, 63
          %s87 = smul.addr %s86, 4
          %s88 = scalar_lea.vmem %s0, %s87
          %s89 = smul.u32 32, %s10
        $region20: #{_max_pool_nchw_taps.1} parent=15 // pred_fallthru
          _
      $region16: #{_max_pool_nchw_taps.1} parent=5 // pred_fallthru
        _
      %p90 = scmp.le.s32.totalorder 1, %s10
      %p91 = scmp.lt.s32.totalorder %s10, 3
      %p92 = pnand %p90, %p91
      %p93 = pneg %p92
      // Predicated region
      $region21: #{_max_pool_nchw_taps.1} parent=5 // pred_check
        _
      $region22: #{_max_pool_nchw_taps.1} parent=5 // pred_check_branch
        %95 = sbr.rel (%p92) target = $region24
      $region23: #{_max_pool_nchw_taps.1} parent=5 // pred_region
        %s96 = ssub.s32 %s10, 1
        %s97 = smul.u32 32, %s15
        %p98 = scmp.lt.s32.totalorder %s97, 63
        %s99 = scalar_select %p98, %s97, 63
        %s100 = smul.addr %s99, 4
        %s101 = scalar_lea.vmem %s0, %s100
        %p102 = pneg %p36
        %p103 = pneg %p33
        %p104 = pneg %p62
        %p105 = pneg %p59
        %s106 = sand.u32 %s49, 1
        %s107 = scalar_lea.sflag [#allocation3], %s106
        %s108 = sand.u32 %s49, 1
        %s109 = smul.addr %s108, 32
        %s110 = scalar_lea.vmem [#allocation2], %s109
        %s111 = smul.u32 32, %s15
        %p112 = scmp.lt.s32.totalorder %s111, 63
        %s113 = scalar_select %p112, %s111, 63
        %s114 = smul.addr %s113, 4
        %s115 = scalar_lea.vmem %s0, %s114
        %s116 = smul.u32 32, %s15
        %s117 = smul.u32 4, %s15
        %v118 = vld [vmem:[%s115] sm:$0xf]
        %v119 = vld [vmem:[%s115 + $0x4] sm:$0xf]
        %v120 = vld [vmem:[%s115 + $0x8] sm:$0xf]
        %v121 = vld [vmem:[%s115 + $0xc] sm:$0xf]
        %v122 = vld [vmem:[%s115 + $0x10] sm:$0xf]
        %v123 = vld [vmem:[%s115 + $0x14] sm:$0xf]
        %v124 = vld [vmem:[%s115 + $0x18] sm:$0xf]
        %v125 = vld [vmem:[%s115 + $0x1c] sm:$0xf]
        %v126 = vld [vmem:[%s115 + $0x20] sm:$0xf]
        %v127 = vld [vmem:[%s115 + $0x24] sm:$0xf]
        %v128 = vld [vmem:[%s115 + $0x28] sm:$0xf]
        %v129 = vld [vmem:[%s115 + $0x2c] sm:$0xf]
        %v130 = vld [vmem:[%s115 + $0x30] sm:$0xf]
        %v131 = vld [vmem:[%s115 + $0x34] sm:$0xf]
        %v132 = vld [vmem:[%s115 + $0x38] sm:$0xf]
        %v133 = vld [vmem:[%s115 + $0x3c] sm:$0xf]
        %v134 = vld [vmem:[%s115 + $0x40] sm:$0xf]
        %v135 = vld [vmem:[%s115 + $0x44] sm:$0xf]
        %v136 = vld [vmem:[%s115 + $0x48] sm:$0xf]
        %v137 = vld [vmem:[%s115 + $0x4c] sm:$0xf]
        %v138 = vld [vmem:[%s115 + $0x50] sm:$0xf]
        %v139 = vld [vmem:[%s115 + $0x54] sm:$0xf]
        %v140 = vld [vmem:[%s115 + $0x58] sm:$0xf]
        %v141 = vld [vmem:[%s115 + $0x5c] sm:$0xf]
        %v142 = vld [vmem:[%s115 + $0x60] sm:$0xf]
        %v143 = vld [vmem:[%s115 + $0x64] sm:$0xf]
        %v144 = vld [vmem:[%s115 + $0x68] sm:$0xf]
        %v145 = vld [vmem:[%s115 + $0x6c] sm:$0xf]
        %v146 = vld [vmem:[%s115 + $0x70] sm:$0xf]
        %v147 = vld [vmem:[%s115 + $0x74] sm:$0xf]
        %v148 = vld [vmem:[%s115 + $0x78] sm:$0xf]
        %v149 = vld [vmem:[%s115 + $0x7c] sm:$0xf]
        %v182 = vrot.slane %v118, 1
        %v183 = vrot.slane %v119, 1
        %v184 = vrot.slane %v120, 1
        %v185 = vrot.slane %v121, 1
        %v186 = vrot.slane %v122, 1
        %v187 = vrot.slane %v123, 1
        %v188 = vrot.slane %v124, 1
        %v189 = vrot.slane %v125, 1
        %v190 = vrot.slane %v126, 1
        %v191 = vrot.slane %v127, 1
        %v192 = vrot.slane %v128, 1
        %v193 = vrot.slane %v129, 1
        %v194 = vrot.slane %v130, 1
        %v195 = vrot.slane %v131, 1
        %v196 = vrot.slane %v132, 1
        %v197 = vrot.slane %v133, 1
        %v198 = vrot.slane %v134, 1
        %v199 = vrot.slane %v135, 1
        %v200 = vrot.slane %v136, 1
        %v201 = vrot.slane %v137, 1
        %v202 = vrot.slane %v138, 1
        %v203 = vrot.slane %v139, 1
        %v204 = vrot.slane %v140, 1
        %v205 = vrot.slane %v141, 1
        %v206 = vrot.slane %v142, 1
        %v207 = vrot.slane %v143, 1
        %v208 = vrot.slane %v144, 1
        %v209 = vrot.slane %v145, 1
        %v210 = vrot.slane %v146, 1
        %v211 = vrot.slane %v147, 1
        %v212 = vrot.slane %v148, 1
        %v213 = vrot.slane %v149, 1
        %v246 = vmax.f32 %v118, %v182
        %v247 = vmax.f32 %v119, %v183
        %v248 = vmax.f32 %v120, %v184
        %v249 = vmax.f32 %v121, %v185
        %v250 = vmax.f32 %v122, %v186
        %v251 = vmax.f32 %v123, %v187
        %v252 = vmax.f32 %v124, %v188
        %v253 = vmax.f32 %v125, %v189
        %v254 = vmax.f32 %v126, %v190
        %v255 = vmax.f32 %v127, %v191
        %v256 = vmax.f32 %v128, %v192
        %v257 = vmax.f32 %v129, %v193
        %v258 = vmax.f32 %v130, %v194
        %v259 = vmax.f32 %v131, %v195
        %v260 = vmax.f32 %v132, %v196
        %v261 = vmax.f32 %v133, %v197
        %v262 = vmax.f32 %v134, %v198
        %v263 = vmax.f32 %v135, %v199
        %v264 = vmax.f32 %v136, %v200
        %v265 = vmax.f32 %v137, %v201
        %v266 = vmax.f32 %v138, %v202
        %v267 = vmax.f32 %v139, %v203
        %v268 = vmax.f32 %v140, %v204
        %v269 = vmax.f32 %v141, %v205
        %v270 = vmax.f32 %v142, %v206
        %v271 = vmax.f32 %v143, %v207
        %v272 = vmax.f32 %v144, %v208
        %v273 = vmax.f32 %v145, %v209
        %v274 = vmax.f32 %v146, %v210
        %v275 = vmax.f32 %v147, %v211
        %v276 = vmax.f32 %v148, %v212
        %v277 = vmax.f32 %v149, %v213
        %v278 = vrot.slane %v118, 2
        %v279 = vrot.slane %v119, 2
        %v280 = vrot.slane %v120, 2
        %v281 = vrot.slane %v121, 2
        %v282 = vrot.slane %v122, 2
        %v283 = vrot.slane %v123, 2
        %v284 = vrot.slane %v124, 2
        %v285 = vrot.slane %v125, 2
        %v286 = vrot.slane %v126, 2
        %v287 = vrot.slane %v127, 2
        %v288 = vrot.slane %v128, 2
        %v289 = vrot.slane %v129, 2
        %v290 = vrot.slane %v130, 2
        %v291 = vrot.slane %v131, 2
        %v292 = vrot.slane %v132, 2
        %v293 = vrot.slane %v133, 2
        %v294 = vrot.slane %v134, 2
        %v295 = vrot.slane %v135, 2
        %v296 = vrot.slane %v136, 2
        %v297 = vrot.slane %v137, 2
        %v298 = vrot.slane %v138, 2
        %v299 = vrot.slane %v139, 2
        %v300 = vrot.slane %v140, 2
        %v301 = vrot.slane %v141, 2
        %v302 = vrot.slane %v142, 2
        %v303 = vrot.slane %v143, 2
        %v304 = vrot.slane %v144, 2
        %v305 = vrot.slane %v145, 2
        %v306 = vrot.slane %v146, 2
        %v307 = vrot.slane %v147, 2
        %v308 = vrot.slane %v148, 2
        %v309 = vrot.slane %v149, 2
        %v342 = vmax.f32 %v246, %v278
        %v343 = vmax.f32 %v247, %v279
        %v344 = vmax.f32 %v248, %v280
        %v345 = vmax.f32 %v249, %v281
        %v346 = vmax.f32 %v250, %v282
        %v347 = vmax.f32 %v251, %v283
        %v348 = vmax.f32 %v252, %v284
        %v349 = vmax.f32 %v253, %v285
        %v350 = vmax.f32 %v254, %v286
        %v351 = vmax.f32 %v255, %v287
        %v352 = vmax.f32 %v256, %v288
        %v353 = vmax.f32 %v257, %v289
        %v354 = vmax.f32 %v258, %v290
        %v355 = vmax.f32 %v259, %v291
        %v356 = vmax.f32 %v260, %v292
        %v357 = vmax.f32 %v261, %v293
        %v358 = vmax.f32 %v262, %v294
        %v359 = vmax.f32 %v263, %v295
        %v360 = vmax.f32 %v264, %v296
        %v361 = vmax.f32 %v265, %v297
        %v362 = vmax.f32 %v266, %v298
        %v363 = vmax.f32 %v267, %v299
        %v364 = vmax.f32 %v268, %v300
        %v365 = vmax.f32 %v269, %v301
        %v366 = vmax.f32 %v270, %v302
        %v367 = vmax.f32 %v271, %v303
        %v368 = vmax.f32 %v272, %v304
        %v369 = vmax.f32 %v273, %v305
        %v370 = vmax.f32 %v274, %v306
        %v371 = vmax.f32 %v275, %v307
        %v372 = vmax.f32 %v276, %v308
        %v373 = vmax.f32 %v277, %v309
        %v374 = vrot.slane %v118, 3
        %v375 = vrot.slane %v119, 3
        %v376 = vrot.slane %v120, 3
        %v377 = vrot.slane %v121, 3
        %v378 = vrot.slane %v122, 3
        %v379 = vrot.slane %v123, 3
        %v380 = vrot.slane %v124, 3
        %v381 = vrot.slane %v125, 3
        %v382 = vrot.slane %v126, 3
        %v383 = vrot.slane %v127, 3
        %v384 = vrot.slane %v128, 3
        %v385 = vrot.slane %v129, 3
        %v386 = vrot.slane %v130, 3
        %v387 = vrot.slane %v131, 3
        %v388 = vrot.slane %v132, 3
        %v389 = vrot.slane %v133, 3
        %v390 = vrot.slane %v134, 3
        %v391 = vrot.slane %v135, 3
        %v392 = vrot.slane %v136, 3
        %v393 = vrot.slane %v137, 3
        %v394 = vrot.slane %v138, 3
        %v395 = vrot.slane %v139, 3
        %v396 = vrot.slane %v140, 3
        %v397 = vrot.slane %v141, 3
        %v398 = vrot.slane %v142, 3
        %v399 = vrot.slane %v143, 3
        %v400 = vrot.slane %v144, 3
        %v401 = vrot.slane %v145, 3
        %v402 = vrot.slane %v146, 3
        %v403 = vrot.slane %v147, 3
        %v404 = vrot.slane %v148, 3
        %v405 = vrot.slane %v149, 3
        %v438 = vmax.f32 %v342, %v374
        %v439 = vmax.f32 %v343, %v375
        %v440 = vmax.f32 %v344, %v376
        %v441 = vmax.f32 %v345, %v377
        %v442 = vmax.f32 %v346, %v378
        %v443 = vmax.f32 %v347, %v379
        %v444 = vmax.f32 %v348, %v380
        %v445 = vmax.f32 %v349, %v381
        %v446 = vmax.f32 %v350, %v382
        %v447 = vmax.f32 %v351, %v383
        %v448 = vmax.f32 %v352, %v384
        %v449 = vmax.f32 %v353, %v385
        %v450 = vmax.f32 %v354, %v386
        %v451 = vmax.f32 %v355, %v387
        %v452 = vmax.f32 %v356, %v388
        %v453 = vmax.f32 %v357, %v389
        %v454 = vmax.f32 %v358, %v390
        %v455 = vmax.f32 %v359, %v391
        %v456 = vmax.f32 %v360, %v392
        %v457 = vmax.f32 %v361, %v393
        %v458 = vmax.f32 %v362, %v394
        %v459 = vmax.f32 %v363, %v395
        %v460 = vmax.f32 %v364, %v396
        %v461 = vmax.f32 %v365, %v397
        %v462 = vmax.f32 %v366, %v398
        %v463 = vmax.f32 %v367, %v399
        %v464 = vmax.f32 %v368, %v400
        %v465 = vmax.f32 %v369, %v401
        %v466 = vmax.f32 %v370, %v402
        %v467 = vmax.f32 %v371, %v403
        %v468 = vmax.f32 %v372, %v404
        %v469 = vmax.f32 %v373, %v405
        %v502 = vrot.slane %v439, 7
        %vm503 = vcmask 1041409
        %v504 = vsel %vm503, %v502, %v438
        %v505 = vrot.slane %v440, 6
        %vm506 = vcmask 1042434
        %v507 = vsel %vm506, %v505, %v504
        %v508 = vrot.slane %v441, 5
        %vm509 = vcmask 1043459
        %v510 = vsel %vm509, %v508, %v507
        %v511 = vrot.slane %v442, 4
        %vm512 = vcmask 1044484
        %v513 = vsel %vm512, %v511, %v510
        %v514 = vrot.slane %v443, 3
        %vm515 = vcmask 1045509
        %v516 = vsel %vm515, %v514, %v513
        %v517 = vrot.slane %v444, 2
        %vm518 = vcmask 1046534
        %v519 = vsel %vm518, %v517, %v516
        %v520 = vrot.slane %v445, 1
        %vm521 = vcmask 1047559
        %v522 = vsel %vm521, %v520, %v519
        %v523 = vrot.slane %v447, 7
        %v524 = vsel %vm503, %v523, %v446
        %v525 = vrot.slane %v448, 6
        %v526 = vsel %vm506, %v525, %v524
        %v527 = vrot.slane %v449, 5
        %v528 = vsel %vm509, %v527, %v526
        %v529 = vrot.slane %v450, 4
        %v530 = vsel %vm512, %v529, %v528
        %v531 = vrot.slane %v451, 3
        %v532 = vsel %vm515, %v531, %v530
        %v533 = vrot.slane %v452, 2
        %v534 = vsel %vm518, %v533, %v532
        %v535 = vrot.slane %v453, 1
        %v536 = vsel %vm521, %v535, %v534
        %v537 = vrot.slane %v455, 7
        %v538 = vsel %vm503, %v537, %v454
        %v539 = vrot.slane %v456, 6
        %v540 = vsel %vm506, %v539, %v538
        %v541 = vrot.slane %v457, 5
        %v542 = vsel %vm509, %v541, %v540
        %v543 = vrot.slane %v458, 4
        %v544 = vsel %vm512, %v543, %v542
        %v545 = vrot.slane %v459, 3
        %v546 = vsel %vm515, %v545, %v544
        %v547 = vrot.slane %v460, 2
        %v548 = vsel %vm518, %v547, %v546
        %v549 = vrot.slane %v461, 1
        %v550 = vsel %vm521, %v549, %v548
        %v551 = vrot.slane %v463, 7
        %v552 = vsel %vm503, %v551, %v462
        %v553 = vrot.slane %v464, 6
        %v554 = vsel %vm506, %v553, %v552
        %v555 = vrot.slane %v465, 5
        %v556 = vsel %vm509, %v555, %v554
        %v557 = vrot.slane %v466, 4
        %v558 = vsel %vm512, %v557, %v556
        %v559 = vrot.slane %v467, 3
        %v560 = vsel %vm515, %v559, %v558
        %v561 = vrot.slane %v468, 2
        %v562 = vsel %vm518, %v561, %v560
        %v563 = vrot.slane %v469, 1
        %v564 = vsel %vm521, %v563, %v562
        %vm569 = vcmask 64512
        %570 = vst.msk [vmem:[%s110] sm:$0xff] %vm569, %v522
        %571 = vst.msk [vmem:[%s110 + $0x8] sm:$0xff] %vm569, %v536
        %572 = vst.msk [vmem:[%s110 + $0x10] sm:$0xff] %vm569, %v550
        %573 = vst.msk [vmem:[%s110 + $0x18] sm:$0xff] %vm569, %v564
        %s574 = sand.u32 %s49, 1
        %s575 = scalar_lea.sflag [#allocation3], %s574
        %s576 = sand.u32 %s49, 1
        %s577 = smul.addr %s576, 32
        %s578 = scalar_lea.vmem [#allocation2], %s577
        // Predicated region
        $region25: #{_max_pool_nchw_taps.1} parent=23 // pred_check
          %p579 = pneg %p59
        $region26: #{_max_pool_nchw_taps.1} parent=23 // pred_check_branch
          %581 = sbr.rel (%p579) target = $region28
        $region27: #{_max_pool_nchw_taps.1} parent=23 // pred_region
          %s582 = smul.u32 4, %s15
          %s584 = ssub.s32 512, 512
          %585 = vsyncadd %s575, %s584
          %s586 = smul.addr %s582, 128
          %s587 = scalar_lea.hbm %s1, %s586
          %s588 = sshll.u32 %s578, 4
          %s589 = int_to_ptr.vmem [resolvable:$true] %s588
          %594 = dma.vmem_to_hbm [thread:$0]  %s589, 512, %s587, %s575, 128, 128, 8
        $region28: #{_max_pool_nchw_taps.1} parent=23 // pred_fallthru
          _
      $region24: #{_max_pool_nchw_taps.1} parent=5 // pred_fallthru
        _
      %p595 = scmp.le.s32.totalorder 2, %s10
      // Predicated region
      $region29: #{_max_pool_nchw_taps.1} parent=5 // pred_check
        %p596 = pneg %p595
      $region30: #{_max_pool_nchw_taps.1} parent=5 // pred_check_branch
        %598 = sbr.rel (%p596) target = $region32
      $region31: #{_max_pool_nchw_taps.1} parent=5 // pred_region
        %s599 = ssub.s32 %s10, 2
        // Predicated region
        $region33: #{_max_pool_nchw_taps.1} parent=31 // pred_check
          %p600 = pneg %p65
        $region34: #{_max_pool_nchw_taps.1} parent=31 // pred_check_branch
          %602 = sbr.rel (%p600) target = $region36
        $region35: #{_max_pool_nchw_taps.1} parent=31 // pred_region
          %s603 = sand.u32 %s50, 1
          %s604 = scalar_lea.sflag [#allocation3], %s603
          %s605 = sand.u32 %s50, 1
          %s606 = smul.addr %s605, 32
          %s607 = scalar_lea.vmem [#allocation2], %s606
          %608 = dma.done %s604, 512
        $region36: #{_max_pool_nchw_taps.1} parent=31 // pred_fallthru
          _
      $region32: #{_max_pool_nchw_taps.1} parent=5 // pred_fallthru
        _
    $region6: #{_max_pool_nchw_taps.1} parent=1 // loop_footer
      %s14 = sadd.s32 1, %s10
    $region7: #{_max_pool_nchw_taps.1} parent=1 // loop_footer_branch
      %9 = sbr.rel target = $region3
    $region8: #{_max_pool_nchw_taps.1} parent=1 // loop_exit
      _
    %609 = vsyncpa [#allocation3], 1
    %s610 = scalar_lea.sflag [#allocation3], 1
    %611 = vsyncpa %s610, 1

</llo_original>
